<compile_context>
chip_gen: v7x
topology: tpu7x:2x2x1
jax: 0.10.0
libtpu: 0.0.40
codegen_flags: <defaults>
</compile_context>

<pallas_src>
import functools

import numpy as np
import jax
import jax.numpy as jnp
from jax.experimental import pallas as pl
from jax.experimental.pallas import tpu as pltpu

LANE = 128
SUBLANE = 16  # multiple of 16 so both f32 (8,128) and bf16 (16,128) tiling are satisfied


def _vmem_limit_bytes():
    """~75% of physical VMEM (96 MiB on v5e/v6e, 48 MiB on v7x); safe fallback 48 MiB."""
    try:
        info = pltpu.get_tpu_info()
        cap = getattr(info, "vmem_capacity_bytes", None)
        if cap:
            return int(cap) * 3 // 4
    except Exception:
        pass
    return 48 * 1024 * 1024


VMEM_LIMIT = _vmem_limit_bytes()


def round_up(x, m):
    return ((x + m - 1) // m) * m


def pad_to(x, shape):
    pads = [(0, s - d) for s, d in zip(shape, x.shape)]
    return jnp.pad(x, pads)


def choose_tiles(n_blk, f_pad, o_pad, vmem_budget):
    """Largest MXU-friendly tile whose double-buffered working set fits the VMEM budget."""
    cands = [t for t in (1024, 512, 256, 128) if t <= n_blk and n_blk % t == 0]
    cands.append(n_blk)  # small-graph fallback: whole node block
    for t in cands:
        need = 2 * 4 * (t * t + t * o_pad + t * f_pad + t * o_pad) + 4 * t * o_pad
        if need <= vmem_budget // 2:  # leave half for weights / compiler scratch
            return t, t
    return n_blk, n_blk


# ----------------------------------------------------------------------------
# Kernel 1: batched unimodal embedding over all node types (one launch)
# ----------------------------------------------------------------------------
def _embed_kernel(x_ref, w_ref, b_ref, m_ref, o_ref):
    y = jnp.dot(x_ref[...], w_ref[...], preferred_element_type=jnp.float32) + b_ref[...]
    o_ref[...] = (y * m_ref[...]).astype(o_ref.dtype)


def pallas_embed_all(x_packed, w_packed, b_packed, mask3, compute_dtype):
    T, n_blk, m_pad = x_packed.shape
    f_pad = w_packed.shape[2]
    return pl.pallas_call(
        _embed_kernel,
        grid=(T,),
        out_shape=jax.ShapeDtypeStruct((T, n_blk, f_pad), compute_dtype),
        in_specs=[
            pl.BlockSpec((None, n_blk, m_pad), lambda t: (t, 0, 0)),
            pl.BlockSpec((None, m_pad, f_pad), lambda t: (t, 0, 0)),
            pl.BlockSpec((None, 1, f_pad), lambda t: (t, 0, 0)),
            pl.BlockSpec((None, n_blk, 1), lambda t: (t, 0, 0)),
        ],
        out_specs=pl.BlockSpec((None, n_blk, f_pad), lambda t: (t, 0, 0)),
        compiler_params=pltpu.CompilerParams(
            dimension_semantics=("parallel",),
            vmem_limit_bytes=VMEM_LIMIT),
    )(x_packed, w_packed, b_packed, mask3)


# ----------------------------------------------------------------------------
# Kernel 2: per-relation projection, once per layer for ALL relations
#   XW[r] = H_all[src_type(r)] @ W_rel[r]
# ----------------------------------------------------------------------------
def _proj_kernel(src_tbl_ref, h_ref, w_ref, o_ref):
    del src_tbl_ref  # consumed only by the index_maps
    o_ref[...] = jnp.dot(h_ref[...], w_ref[...],
                         preferred_element_type=jnp.float32).astype(o_ref.dtype)


def project_all_relations(h_all, w_rel_packed, src_tbl, *, n_blk, tile_m, compute_dtype):
    R = w_rel_packed.shape[0]
    f_pad = h_all.shape[1]
    o_pad = w_rel_packed.shape[2]
    n_m = n_blk // tile_m
    return pl.pallas_call(
        _proj_kernel,
        grid_spec=pltpu.PrefetchScalarGridSpec(
            num_scalar_prefetch=1,
            grid=(R, n_m),
            in_specs=[
                # src node-feature tile, selected by the prefetched src-type table
                pl.BlockSpec((tile_m, f_pad), lambda r, i, st: (st[r] * n_m + i, 0)),
                # W_rel[r] (block index constant across i -> fetched once per r)
                pl.BlockSpec((None, f_pad, o_pad), lambda r, i, st: (r, 0, 0)),
            ],
            out_specs=pl.BlockSpec((None, tile_m, o_pad), lambda r, i, st: (r, i, 0)),
        ),
        out_shape=jax.ShapeDtypeStruct((R, n_blk, o_pad), compute_dtype),
        compiler_params=pltpu.CompilerParams(
            dimension_semantics=("parallel", "parallel"),
            vmem_limit_bytes=VMEM_LIMIT),
    )(src_tbl, h_all, w_rel_packed)


# ----------------------------------------------------------------------------
# Kernel 3: fused aggregation + self-loop + bias + activation for ALL dst types
#   grid = (T, dst_tiles, R_max, k_tiles)
#   acc[t,i] := H[dst=t, i] @ W_loop + b                      (init, s==0 && k==0)
#   acc[t,i] += deg_inv[t,s,i] * (A[t,s,i,k] @ XW[rel(t,s),k]) (every step)
#   out[t,i] = mask * act(acc[t,i])                            (flush, last s,k)
# ----------------------------------------------------------------------------
def _rgcn_agg_kernel(rel_tbl_ref, a_ref, xw_ref, di_ref, hd_ref, wl_ref, b_ref,
                     mask_ref, o_ref, acc_ref, *, relu):
    del rel_tbl_ref  # consumed only by the index_maps
    s = pl.program_id(2)
    k = pl.program_id(3)
    ns = pl.num_programs(2)
    nk = pl.num_programs(3)

    @pl.when(jnp.logical_and(s == 0, k == 0))
    def _():
        # init accumulator with self-loop + bias (keeps flush step light)
        acc_ref[...] = (jnp.dot(hd_ref[...], wl_ref[...],
                                preferred_element_type=jnp.float32) + b_ref[...])

    msg = jnp.dot(a_ref[...], xw_ref[...], preferred_element_type=jnp.float32)
    acc_ref[...] += di_ref[...] * msg  # f32 'right' degree normalisation

    @pl.when(jnp.logical_and(s == ns - 1, k == nk - 1))
    def _():
        y = acc_ref[...]
        if relu:
            y = jnp.maximum(y, 0.0)
        o_ref[...] = (y * mask_ref[...]).astype(o_ref.dtype)  # zero padded rows


def rgcn_layer_all(h_all, xw, a_packed, deg_inv, rel_tbl_flat, w_loop, bias, mask,
                   relu, *, T, n_blk, tile_m, tile_k, compute_dtype):
    R_max = a_packed.shape[1]
    f_pad = h_all.shape[1]
    o_pad = w_loop.shape[1]
    n_m = n_blk // tile_m
    n_k = n_blk // tile_k
    grid = (T, n_m, R_max, n_k)

    return pl.pallas_call(
        functools.partial(_rgcn_agg_kernel, relu=relu),
        grid_spec=pltpu.PrefetchScalarGridSpec(
            num_scalar_prefetch=1,
            grid=grid,
            in_specs=[
                # raw 0/1 adjacency tile A[t, s, i, k]
                pl.BlockSpec((None, None, tile_m, tile_k),
                             lambda t, i, s, k, rt: (t, s, i, k)),
                # precomputed projection XW[rel(t,s), k]
                pl.BlockSpec((None, tile_k, o_pad),
                             lambda t, i, s, k, rt: (rt[t * R_max + s], k, 0)),
                # per-relation inverse in-degree of the dst rows (f32)
                pl.BlockSpec((None, None, tile_m, 1),
                             lambda t, i, s, k, rt: (t, s, i, 0)),
                # dst node features (self-loop input)
                pl.BlockSpec((tile_m, f_pad),
                             lambda t, i, s, k, rt: (t * n_m + i, 0)),
                # shared self-loop weight / bias (resident: block index constant)
                pl.BlockSpec((f_pad, o_pad), lambda t, i, s, k, rt: (0, 0)),
                pl.BlockSpec((1, o_pad), lambda t, i, s, k, rt: (0, 0)),
                # valid-row mask (zeroes padded dst rows at flush)
                pl.BlockSpec((tile_m, 1),
                             lambda t, i, s, k, rt: (t * n_m + i, 0)),
            ],
            out_specs=pl.BlockSpec((tile_m, o_pad),
                                   lambda t, i, s, k, rt: (t * n_m + i, 0)),
            scratch_shapes=[pltpu.VMEM((tile_m, o_pad), jnp.float32)],
        ),
        out_shape=jax.ShapeDtypeStruct((T * n_blk, o_pad), compute_dtype),
        compiler_params=pltpu.CompilerParams(
            dimension_semantics=("parallel", "parallel", "arbitrary", "arbitrary"),
            vmem_limit_bytes=VMEM_LIMIT),
    )(rel_tbl_flat, a_packed, xw, deg_inv, h_all, w_loop, bias, mask)


# ----------------------------------------------------------------------------
# Parameter construction (real sizes) + padding / packing for the kernels
# ----------------------------------------------------------------------------
def glorot(key, shape):
    fan_in, fan_out = shape
    scale = jnp.sqrt(6.0 / (fan_in + fan_out))
    return jax.random.uniform(key, shape, jnp.float32, -scale, scale)


def make_params(key, ntypes, modality_sizes, rel_names, input_dim, h_dim, out_dim,
                num_hidden_layers):
    params = {"embed": {}, "layers": []}
    keys = jax.random.split(key, 2)

    ek = jax.random.split(keys[0], len(ntypes))
    for i, nt in enumerate(ntypes):
        mod_size = list(modality_sizes[nt].values())[0]
        k1, _ = jax.random.split(ek[i])
        params["embed"][nt] = {
            "w": glorot(k1, (mod_size, input_dim)),
            "b": jnp.zeros((input_dim,), jnp.float32),
        }

    dims = [(input_dim, h_dim)] + [(h_dim, h_dim)] * num_hidden_layers + [(h_dim, out_dim)]
    lk = jax.random.split(keys[1], len(dims))
    for li, (fi, fo) in enumerate(dims):
        rk = jax.random.split(lk[li], len(rel_names) + 1)
        params["layers"].append({
            "w_rel": {rel: glorot(rk[ri], (fi, fo)) for ri, rel in enumerate(rel_names)},
            "w_loop": glorot(rk[-1], (fi, fo)),
            "bias": jnp.zeros((fo,), jnp.float32),
            "relu": li < len(dims) - 1,
        })
    return params


def pack_params(params, ntypes, rel_names, m_pad, f_pad, compute_dtype):
    """Zero-pad weights to lane-dense shapes; stack W_rel in global relation order."""
    w_emb = jnp.stack([pad_to(params["embed"][nt]["w"], (m_pad, f_pad))
                       for nt in ntypes], 0).astype(compute_dtype)
    b_emb = jnp.stack([pad_to(params["embed"][nt]["b"].reshape(1, -1), (1, f_pad))
                       for nt in ntypes], 0)  # bias kept f32
    layers = []
    for layer in params["layers"]:
        layers.append({
            "w_rel": jnp.stack([pad_to(layer["w_rel"][rel], (f_pad, f_pad))
                                for rel in rel_names], 0).astype(compute_dtype),
            "w_loop": pad_to(layer["w_loop"], (f_pad, f_pad)).astype(compute_dtype),
            "bias": pad_to(layer["bias"].reshape(1, -1), (1, f_pad)),  # f32
            "relu": layer["relu"],
        })
    return {"w_emb": w_emb, "b_emb": b_emb, "layers": layers}


def build_graph_packing(ntypes, num_nodes, rel_names, adj, n_blk):
    """Pack the hetero graph for the fused layer kernel.

    Returns raw 0/1 adjacency A[T, R_max, n_blk, n_blk], per-relation inverse
    in-degree deg_inv[T, R_max, n_blk, 1] (f32, applied in-kernel so A stays
    bf16-exact), flattened relation table [T*R_max] -> global relation index,
    src-type table [R] and the valid-row mask [T*n_blk, 1].
    """
    tindex = {nt: i for i, nt in enumerate(ntypes)}
    T = len(ntypes)
    src_tbl = np.array([tindex[rel[0]] for rel in rel_names], np.int32)
    rels_by_dst = {nt: [ri for ri, rel in enumerate(rel_names) if rel[2] == nt]
                   for nt in ntypes}
    R_max = max(1, max(len(v) for v in rels_by_dst.values()))

    a_packed = np.zeros((T, R_max, n_blk, n_blk), np.float32)
    deg_inv = np.zeros((T, R_max, n_blk, 1), np.float32)
    rel_tbl = np.zeros((T, R_max), np.int32)
    mask = np.zeros((T * n_blk, 1), np.float32)

    for ti, nt in enumerate(ntypes):
        mask[ti * n_blk: ti * n_blk + num_nodes[nt], 0] = 1.0
        for s, ri in enumerate(rels_by_dst[nt]):
            rel = rel_names[ri]
            a = np.asarray(adj[rel], np.float32)
            a_packed[ti, s, :a.shape[0], :a.shape[1]] = a
            deg = a.sum(axis=1)
            # GraphConv(norm='right'): divide messages by per-relation in-degree (>=1)
            deg_inv[ti, s, :a.shape[0], 0] = 1.0 / np.maximum(deg, 1.0)
            rel_tbl[ti, s] = ri
        # padded relation slots: A == 0, deg_inv == 0, rel index 0 (contribution is zero)

    return {
        "a": a_packed,
        "deg_inv": deg_inv,
        "rel_tbl": rel_tbl.reshape(-1),
        "src_tbl": src_tbl,
        "mask": mask,
        "R_max": R_max,
    }


# ----------------------------------------------------------------------------
# Forward pass
# ----------------------------------------------------------------------------
def base_rgcn_hetero_forward(feats, packed_params, graph_pack, ntypes, num_nodes, *,
                             n_blk, tile_m, tile_k, m_pad, f_pad, out_dim,
                             compute_dtype=jnp.float32):
    T = len(ntypes)

    a_packed = jnp.asarray(graph_pack["a"]).astype(compute_dtype)   # raw 0/1, bf16-exact
    deg_inv = jnp.asarray(graph_pack["deg_inv"], jnp.float32)
    rel_tbl = jnp.asarray(graph_pack["rel_tbl"], jnp.int32)
    src_tbl = jnp.asarray(graph_pack["src_tbl"], jnp.int32)
    mask = jnp.asarray(graph_pack["mask"], jnp.float32)

    # 1. unimodal embedding for all node types in one launch
    x_packed = jnp.stack([pad_to(jnp.asarray(feats[nt], jnp.float32), (n_blk, m_pad))
                          for nt in ntypes], 0).astype(compute_dtype)
    mask3 = mask.reshape(T, n_blk, 1)
    emb = pallas_embed_all(x_packed, packed_params["w_emb"], packed_params["b_emb"],
                           mask3, compute_dtype)
    h_all = emb.reshape(T * n_blk, f_pad)   # packed features, one row-block per ntype

    # 2. stacked fused RelGraphConvLayers (one projection + one aggregation call each)
    for layer in packed_params["layers"]:
        xw = project_all_relations(h_all, layer["w_rel"], src_tbl,
                                   n_blk=n_blk, tile_m=tile_m,
                                   compute_dtype=compute_dtype)
        h_all = rgcn_layer_all(h_all, xw, a_packed, deg_inv, rel_tbl,
                               layer["w_loop"], layer["bias"], mask, layer["relu"],
                               T=T, n_blk=n_blk, tile_m=tile_m, tile_k=tile_k,
                               compute_dtype=compute_dtype)

    # 3. strip node / feature padding
    h_all = h_all.astype(jnp.float32)
    return {nt: h_all[i * n_blk: i * n_blk + num_nodes[nt], :out_dim]
            for i, nt in enumerate(ntypes)}


# ----------------------------------------------------------------------------
# Plain numpy reference (unpadded) for correctness validation
# ----------------------------------------------------------------------------
def reference_forward(feats, params, rel_names, adj, ntypes):
    h = {}
    for nt in ntypes:
        x = np.asarray(feats[nt], np.float32)
        w = np.asarray(params["embed"][nt]["w"], np.float32)
        b = np.asarray(params["embed"][nt]["b"], np.float32)
        h[nt] = x @ w + b
    for layer in params["layers"]:
        new_h = {}
        for dst in ntypes:
            fo = layer["w_loop"].shape[1]
            msg = np.zeros((h[dst].shape[0], fo), np.float32)
            for rel in rel_names:
                src, _, d = rel
                if d != dst:
                    continue
                a = np.asarray(adj[rel], np.float32)
                a_norm = a / np.maximum(a.sum(axis=1, keepdims=True), 1.0)
                msg += a_norm @ (h[src] @ np.asarray(layer["w_rel"][rel], np.float32))
            y = msg + h[dst] @ np.asarray(layer["w_loop"], np.float32) \
                + np.asarray(layer["bias"], np.float32)
            if layer["relu"]:
                y = np.maximum(y, 0.0)
            new_h[dst] = y
        h = new_h
    return h


# ----------------------------------------------------------------------------
if __name__ == "__main__":
    key = jax.random.PRNGKey(0)

    # synthetic heterogeneous graph
    ntypes = ["disease", "drug", "gene"]
    num_nodes = {"disease": 12, "drug": 16, "gene": 8}
    modality_sizes = {
        "disease": {"desc": 24},
        "drug": {"fingerprint": 20},
        "gene": {"expression": 16},
    }
    rel_names = sorted([
        ("disease", "disease_gene", "gene"),
        ("drug", "drug_disease", "disease"),
        ("drug", "drug_drug", "drug"),
        ("gene", "gene_disease", "disease"),
    ])

    input_dim, h_dim, out_dim = 32, 32, 16
    num_hidden_layers = 1

    # deterministic dense 0/1 adjacencies A[dst, src]
    akeys = jax.random.split(key, len(rel_names))
    adj = {}
    for i, (src, et, dst) in enumerate(rel_names):
        a = jax.random.bernoulli(akeys[i], 0.4,
                                 (num_nodes[dst], num_nodes[src])).astype(jnp.float32)
        adj[(src, et, dst)] = a

    # deterministic input modality features
    fkeys = jax.random.split(jax.random.PRNGKey(0), len(ntypes))
    feats = {
        nt: jax.random.normal(fkeys[i],
                              (num_nodes[nt], list(modality_sizes[nt].values())[0]),
                              jnp.float32)
        for i, nt in enumerate(ntypes)
    }

    params = make_params(jax.random.PRNGKey(0), ntypes, modality_sizes, rel_names,
                         input_dim, h_dim, out_dim, num_hidden_layers)

    # ---- padding / tiling configuration (lane-dense, VMEM-budget aware) ----
    f_pad = round_up(max(input_dim, h_dim, out_dim), LANE)
    m_pad = round_up(max(list(ms.values())[0] for ms in modality_sizes.values()), LANE)
    max_nodes = max(num_nodes.values())
    n_blk = round_up(max_nodes, SUBLANE)
    tile_m, tile_k = choose_tiles(n_blk, f_pad, f_pad, VMEM_LIMIT)

    graph_pack = build_graph_packing(ntypes, num_nodes, rel_names, adj, n_blk)
    ref = reference_forward(feats, params, rel_names, adj, ntypes)

    # --- f32 path (reference numerics), tight tolerance ---
    packed_f32 = pack_params(params, ntypes, rel_names, m_pad, f_pad, jnp.float32)
    out = base_rgcn_hetero_forward(
        feats, packed_f32, graph_pack, ntypes, num_nodes,
        n_blk=n_blk, tile_m=tile_m, tile_k=tile_k, m_pad=m_pad, f_pad=f_pad,
        out_dim=out_dim, compute_dtype=jnp.float32)
    out = jax.tree_util.tree_map(jax.block_until_ready, out)
    for nt in ntypes:
        assert out[nt].shape == (num_nodes[nt], out_dim), out[nt].shape
        assert out[nt].dtype == jnp.float32
        np.testing.assert_allclose(np.asarray(out[nt], np.float32), ref[nt],
                                   rtol=5e-4, atol=5e-4)

    # --- bf16-MXU / f32-accumulate path (perf path on v5e/v6e/v7x), smoke tolerance ---
    packed_bf16 = pack_params(params, ntypes, rel_names, m_pad, f_pad, jnp.bfloat16)
    out_bf16 = base_rgcn_hetero_forward(
        feats, packed_bf16, graph_pack, ntypes, num_nodes,
        n_blk=n_blk, tile_m=tile_m, tile_k=tile_k, m_pad=m_pad, f_pad=f_pad,
        out_dim=out_dim, compute_dtype=jnp.bfloat16)
    out_bf16 = jax.tree_util.tree_map(jax.block_until_ready, out_bf16)
    for nt in ntypes:
        np.testing.assert_allclose(np.asarray(out_bf16[nt], np.float32), ref[nt],
                                   rtol=1e-1, atol=1e-1)

    print("KERNEL_OK")
</pallas_src>

<mosaic_0001>
module attributes {stable_mosaic.version = 11 : i64} {
  func.func @_embed_kernel(%arg0: i32, %arg1: memref<1x16x128xf32, #tpu.memory_space<vmem>>, %arg2: memref<1x128x128xf32, #tpu.memory_space<vmem>>, %arg3: memref<1x1x128xf32, #tpu.memory_space<vmem>>, %arg4: memref<1x16x1xf32, #tpu.memory_space<vmem>>, %arg5: memref<1x16x128xf32, #tpu.memory_space<vmem>>) attributes {dimension_semantics = [#tpu.dimension_semantics<parallel>], iteration_bounds = array<i64: 3>, scalar_prefetch = 0 : i64, scratch_operands = 0 : i64, tpu.core_type = #tpu.core_type<tc>, window_params = [{transform_indices = @transform_0, window_bounds = array<i64: 1, 16, 128>}, {transform_indices = @transform_1, window_bounds = array<i64: 1, 128, 128>}, {transform_indices = @transform_2, window_bounds = array<i64: 1, 1, 128>}, {transform_indices = @transform_3, window_bounds = array<i64: 1, 16, 1>}, {transform_indices = @transform_4, window_bounds = array<i64: 1, 16, 128>}]} {
    %c0 = arith.constant 0 : index
    %c0_0 = arith.constant 0 : index
    %c0_1 = arith.constant 0 : index
    %0 = vector.load %arg1[%c0, %c0_0, %c0_1] : memref<1x16x128xf32, #tpu.memory_space<vmem>>, vector<1x16x128xf32>
    %1 = vector.shape_cast %0 : vector<1x16x128xf32> to vector<16x128xf32>
    %c0_2 = arith.constant 0 : index
    %c0_3 = arith.constant 0 : index
    %c0_4 = arith.constant 0 : index
    %2 = vector.load %arg2[%c0_2, %c0_3, %c0_4] : memref<1x128x128xf32, #tpu.memory_space<vmem>>, vector<1x128x128xf32>
    %3 = vector.shape_cast %2 : vector<1x128x128xf32> to vector<128x128xf32>
    %cst = arith.constant dense<0.000000e+00> : vector<16x128xf32>
    %4 = tpu.matmul %1, %3, %cst {dimension_numbers = #tpu.dot_dimension_numbers<[1], [0], [0], [1], [0, 0, 1, 1], [], []>} : vector<16x128xf32>, vector<128x128xf32>, vector<16x128xf32> -> vector<16x128xf32>
    %c0_5 = arith.constant 0 : index
    %c0_6 = arith.constant 0 : index
    %c0_7 = arith.constant 0 : index
    %5 = vector.load %arg3[%c0_5, %c0_6, %c0_7] : memref<1x1x128xf32, #tpu.memory_space<vmem>>, vector<1x1x128xf32>
    %6 = vector.shape_cast %5 : vector<1x1x128xf32> to vector<1x128xf32>
    %7 = vector.broadcast %6 : vector<1x128xf32> to vector<16x128xf32>
    %8 = arith.addf %4, %7 : vector<16x128xf32>
    %c0_8 = arith.constant 0 : index
    %c0_9 = arith.constant 0 : index
    %c0_10 = arith.constant 0 : index
    %9 = vector.load %arg4[%c0_8, %c0_9, %c0_10] : memref<1x16x1xf32, #tpu.memory_space<vmem>>, vector<1x16x1xf32>
    %10 = vector.shape_cast %9 : vector<1x16x1xf32> to vector<16x1xf32>
    %11 = vector.broadcast %10 : vector<16x1xf32> to vector<16x128xf32>
    %12 = arith.mulf %8, %11 : vector<16x128xf32>
    %c0_11 = arith.constant 0 : index
    %c0_12 = arith.constant 0 : index
    %c0_13 = arith.constant 0 : index
    %13 = vector.load %arg5[%c0_11, %c0_12, %c0_13] : memref<1x16x128xf32, #tpu.memory_space<vmem>>, vector<1x16x128xf32>
    %14 = vector.shape_cast %13 : vector<1x16x128xf32> to vector<16x128xf32>
    %15 = vector.shape_cast %12 : vector<16x128xf32> to vector<1x16x128xf32>
    tpu.vector_store %arg5[%c0_11, %c0_12, %c0_13], %15 {strides = array<i32>} : memref<1x16x128xf32, #tpu.memory_space<vmem>>, vector<1x16x128xf32>,
    return
  }
  func.func @transform_0(%arg0: i32) -> (i32, i32, i32) {
    %c0_i32 = arith.constant 0 : i32
    %c0_i32_0 = arith.constant 0 : i32
    %c0_i32_1 = arith.constant 0 : i32
    return %arg0, %c0_i32, %c0_i32_0 : i32, i32, i32
  }
  func.func @transform_1(%arg0: i32) -> (i32, i32, i32) {
    %c0_i32 = arith.constant 0 : i32
    %c0_i32_0 = arith.constant 0 : i32
    %c0_i32_1 = arith.constant 0 : i32
    return %arg0, %c0_i32, %c0_i32_0 : i32, i32, i32
  }
  func.func @transform_2(%arg0: i32) -> (i32, i32, i32) {
    %c0_i32 = arith.constant 0 : i32
    %c0_i32_0 = arith.constant 0 : i32
    %c0_i32_1 = arith.constant 0 : i32
    return %arg0, %c0_i32, %c0_i32_0 : i32, i32, i32
  }
  func.func @transform_3(%arg0: i32) -> (i32, i32, i32) {
    %c0_i32 = arith.constant 0 : i32
    %c0_i32_0 = arith.constant 0 : i32
    %c0_i32_1 = arith.constant 0 : i32
    return %arg0, %c0_i32, %c0_i32_0 : i32, i32, i32
  }
  func.func @transform_4(%arg0: i32) -> (i32, i32, i32) {
    %c0_i32 = arith.constant 0 : i32
    %c0_i32_0 = arith.constant 0 : i32
    %c0_i32_1 = arith.constant 0 : i32
    return %arg0, %c0_i32, %c0_i32_0 : i32, i32, i32
  }
}

</mosaic_0001>

<llo_original>
// kernel: tpu_custom_call.1
$region0: #{tpu_custom_call.1}
  #allocation0 [shape = 'u32[]', space=smem, size = 0x4, offset = 0x4, fixed_abs, tag = 'smem constant byte address 0x4 - core index']
  #allocation1 [shape = 'u32[144,128]{1,0:T(1,128)}', space=vmem, size = 0x12000, scoped, tag = 'internal scratch']
  %s0 = inlined_call_operand.vmem [shape: f32[3,16,128], index: 0, kind: input, shape index: {}]
  %s1 = inlined_call_operand.hbm [shape: f32[3,128,128], index: 1, kind: input, shape index: {}]
  %s2 = inlined_call_operand.vmem [shape: f32[3,1,128], index: 2, kind: input, shape index: {}]
  %s3 = inlined_call_operand.vmem [shape: f32[3,16,1], index: 3, kind: input, shape index: {}]
  %s4 = inlined_call_operand.hbm [shape: f32[3,16,128], index: 4, kind: output, shape index: {}]
  %s5 = sld [smem:[#allocation0]]
  $region53: #{tpu_custom_call.1} parent=0
    _
  %s7 = ssub.s32 1, %s5
  %s8 = scalar_select 0, %s7, %s5
  $region1: #{tpu_custom_call.1} parent=0
    #allocation2 [shape = 'u8[131072]{0}', space=vmem, size = 0x20000, scoped, tag = 'input window, operand 1']
    #allocation3 [shape = 's32[2]{0}', space=sflag, size = 0x8, scoped, tag = 'scoped memory for tpu_custom_call.1']
    #allocation4 [shape = 's32[2]{0}', space=sflag, size = 0x8, scoped, tag = 'scoped memory for tpu_custom_call.1']
    #allocation5 [shape = 'u8[16384]{0}', space=vmem, size = 0x4000, scoped, tag = 'output window, operand 0']
    %9 = vsyncpa [#allocation3], 0
    %s10 = scalar_lea.sflag [#allocation3], 1
    %11 = vsyncpa %s10, 0
    %12 = vsyncpa [#allocation4], 0
    %s13 = scalar_lea.sflag [#allocation4], 1
    %14 = vsyncpa %s13, 0
    loop: start=0, step=1, limit=5
    $region2: #{tpu_custom_call.1} parent=1 // loop_pre_header
      _
    $region3: #{tpu_custom_call.1} parent=1 // loop_header
      %s16 = sphi 0, %s20
      %p17 = scmp.ge.s32.totalorder %s16, 5
      %s26 = sphi 0, %s28
      %s29 = sphi 0, %s26
      %s30 = sphi 0, %s29
      %s46 = sphi 0, %s30
      %s52 = sphi 0, %s54
      %s55 = sphi 0, %s52
      %s56 = sphi 0, %s55
      %s72 = sphi 0, %s56
      %s78 = sphi 0, %s80
      %s81 = sphi 0, %s78
      %s82 = sphi 0, %s81
      %s98 = sphi 0, %s82
      %s104 = sphi 0, %s106
      %s107 = sphi 0, %s104
      %s108 = sphi 0, %s107
      %s124 = sphi 0, %s108
      %s130 = sphi 0, %s132
      %s133 = sphi 0, %s130
      %s134 = sphi 0, %s133
      %s150 = sphi 0, %s134
    $region4: #{tpu_custom_call.1} parent=1 // loop_header_branch
      %19 = sbr.rel (%p17) target = $region8
    $region5: #{tpu_custom_call.1} parent=1 // loop_body
      %s21 = ssub.s32 %s16, 1
      %s22 = ssub.s32 %s16, 2
      %s23 = sadd.s32 %s16, 1
      %s24 = ssub.s32 %s16, %s23
      %p25 = scmp.eq.s32.totalorder %s24, 0
      %s27 = sadd.s32 %s26, 1
      %s28 = scalar_select %p25, %s26, %s27
      %p31 = pneg %p25
      %p32 = scmp.eq.s32.totalorder %s16, 2
      %p33 = por %p31, %p32
      %p34 = scmp.ne.s32.totalorder %s26, %s29
      %p35 = scmp.eq.s32.totalorder %s16, 0
      %p36 = por %p34, %p35
      %p37 = scmp.ne.s32.totalorder %s26, %s29
      %p38 = scmp.eq.s32.totalorder %s21, 2
      %p39 = por %p37, %p38
      %p40 = scmp.ne.s32.totalorder %s29, %s30
      %p41 = scmp.eq.s32.totalorder %s21, 0
      %p42 = por %p40, %p41
      %p43 = scmp.ne.s32.totalorder %s29, %s30
      %p44 = scmp.eq.s32.totalorder %s22, 2
      %p45 = por %p43, %p44
      %p47 = scmp.ne.s32.totalorder %s30, %s46
      %p48 = scmp.eq.s32.totalorder %s22, 0
      %p49 = por %p47, %p48
      %s50 = ssub.s32 %s16, %s23
      %p51 = scmp.eq.s32.totalorder %s50, 0
      %s53 = sadd.s32 %s52, 1
      %s54 = scalar_select %p51, %s52, %s53
      %p57 = pneg %p51
      %p58 = scmp.eq.s32.totalorder %s16, 2
      %p59 = por %p57, %p58
      %p60 = scmp.ne.s32.totalorder %s52, %s55
      %p61 = scmp.eq.s32.totalorder %s16, 0
      %p62 = por %p60, %p61
      %p63 = scmp.ne.s32.totalorder %s52, %s55
      %p64 = scmp.eq.s32.totalorder %s21, 2
      %p65 = por %p63, %p64
      %p66 = scmp.ne.s32.totalorder %s55, %s56
      %p67 = scmp.eq.s32.totalorder %s21, 0
      %p68 = por %p66, %p67
      %p69 = scmp.ne.s32.totalorder %s55, %s56
      %p70 = scmp.eq.s32.totalorder %s22, 2
      %p71 = por %p69, %p70
      %p73 = scmp.ne.s32.totalorder %s56, %s72
      %p74 = scmp.eq.s32.totalorder %s22, 0
      %p75 = por %p73, %p74
      %s76 = ssub.s32 %s16, %s23
      %p77 = scmp.eq.s32.totalorder %s76, 0
      %s79 = sadd.s32 %s78, 1
      %s80 = scalar_select %p77, %s78, %s79
      %p83 = pneg %p77
      %p84 = scmp.eq.s32.totalorder %s16, 2
      %p85 = por %p83, %p84
      %p86 = scmp.ne.s32.totalorder %s78, %s81
      %p87 = scmp.eq.s32.totalorder %s16, 0
      %p88 = por %p86, %p87
      %p89 = scmp.ne.s32.totalorder %s78, %s81
      %p90 = scmp.eq.s32.totalorder %s21, 2
      %p91 = por %p89, %p90
      %p92 = scmp.ne.s32.totalorder %s81, %s82
      %p93 = scmp.eq.s32.totalorder %s21, 0
      %p94 = por %p92, %p93
      %p95 = scmp.ne.s32.totalorder %s81, %s82
      %p96 = scmp.eq.s32.totalorder %s22, 2
      %p97 = por %p95, %p96
      %p99 = scmp.ne.s32.totalorder %s82, %s98
      %p100 = scmp.eq.s32.totalorder %s22, 0
      %p101 = por %p99, %p100
      %s102 = ssub.s32 %s16, %s23
      %p103 = scmp.eq.s32.totalorder %s102, 0
      %s105 = sadd.s32 %s104, 1
      %s106 = scalar_select %p103, %s104, %s105
      %p109 = pneg %p103
      %p110 = scmp.eq.s32.totalorder %s16, 2
      %p111 = por %p109, %p110
      %p112 = scmp.ne.s32.totalorder %s104, %s107
      %p113 = scmp.eq.s32.totalorder %s16, 0
      %p114 = por %p112, %p113
      %p115 = scmp.ne.s32.totalorder %s104, %s107
      %p116 = scmp.eq.s32.totalorder %s21, 2
      %p117 = por %p115, %p116
      %p118 = scmp.ne.s32.totalorder %s107, %s108
      %p119 = scmp.eq.s32.totalorder %s21, 0
      %p120 = por %p118, %p119
      %p121 = scmp.ne.s32.totalorder %s107, %s108
      %p122 = scmp.eq.s32.totalorder %s22, 2
      %p123 = por %p121, %p122
      %p125 = scmp.ne.s32.totalorder %s108, %s124
      %p126 = scmp.eq.s32.totalorder %s22, 0
      %p127 = por %p125, %p126
      %s128 = ssub.s32 %s16, %s23
      %p129 = scmp.eq.s32.totalorder %s128, 0
      %s131 = sadd.s32 %s130, 1
      %s132 = scalar_select %p129, %s130, %s131
      %p135 = pneg %p129
      %p136 = scmp.eq.s32.totalorder %s16, 2
      %p137 = por %p135, %p136
      %p138 = scmp.ne.s32.totalorder %s130, %s133
      %p139 = scmp.eq.s32.totalorder %s16, 0
      %p140 = por %p138, %p139
      %p141 = scmp.ne.s32.totalorder %s130, %s133
      %p142 = scmp.eq.s32.totalorder %s21, 2
      %p143 = por %p141, %p142
      %p144 = scmp.ne.s32.totalorder %s133, %s134
      %p145 = scmp.eq.s32.totalorder %s21, 0
      %p146 = por %p144, %p145
      %p147 = scmp.ne.s32.totalorder %s133, %s134
      %p148 = scmp.eq.s32.totalorder %s22, 2
      %p149 = por %p147, %p148
      %p151 = scmp.ne.s32.totalorder %s134, %s150
      %p152 = scmp.eq.s32.totalorder %s22, 0
      %p153 = por %p151, %p152
      %p154 = scmp.le.s32.totalorder 1, %s16
      %p155 = scmp.lt.s32.totalorder %s16, 4
      %p156 = pnand %p154, %p155
      %p157 = pneg %p156
      // Predicated region
      $region9: #{tpu_custom_call.1} parent=5 // pred_check
        _
      $region10: #{tpu_custom_call.1} parent=5 // pred_check_branch
        %159 = sbr.rel (%p156) target = $region12
      $region11: #{tpu_custom_call.1} parent=5 // pred_region
        %s160 = ssub.s32 %s16, 1
      $region12: #{tpu_custom_call.1} parent=5 // pred_fallthru
        _
      %p161 = scmp.lt.s32.totalorder %s16, 3
      // Predicated region
      $region13: #{tpu_custom_call.1} parent=5 // pred_check
        %p162 = pneg %p161
      $region14: #{tpu_custom_call.1} parent=5 // pred_check_branch
        %164 = sbr.rel (%p162) target = $region16
      $region15: #{tpu_custom_call.1} parent=5 // pred_region
        // Predicated region
        $region17: #{tpu_custom_call.1} parent=15 // pred_check
          %p165 = pneg %p36
        $region18: #{tpu_custom_call.1} parent=15 // pred_check_branch
          %167 = sbr.rel (%p165) target = $region20
        $region19: #{tpu_custom_call.1} parent=15 // pred_region
          %p168 = scmp.lt.s32.totalorder %s16, 2
          %s169 = scalar_select %p168, %s16, 2
          %s170 = smul.addr %s169, 2
          %s171 = smul.addr %s170, 8
          %s172 = scalar_lea.vmem %s0, %s171
        $region20: #{tpu_custom_call.1} parent=15 // pred_fallthru
          _
        // Predicated region
        $region21: #{tpu_custom_call.1} parent=15 // pred_check
          %p173 = pneg %p62
        $region22: #{tpu_custom_call.1} parent=15 // pred_check_branch
          %175 = sbr.rel (%p173) target = $region24
        $region23: #{tpu_custom_call.1} parent=15 // pred_region
          %s176 = sand.u32 %s52, 1
          %s177 = scalar_lea.sflag [#allocation3], %s176
          %s178 = sand.u32 %s52, 1
          %s179 = smul.addr %s178, 128
          %s180 = scalar_lea.vmem [#allocation2], %s179
          %s182 = ssub.s32 2048, 2048
          %183 = vsyncadd %s177, %s182
          %s184 = smul.addr %s16, 16
          %s185 = smul.addr %s184, 128
          %s186 = scalar_lea.hbm %s1, %s185
          %s187 = sshll.u32 %s180, 4
          %s188 = int_to_ptr.vmem [resolvable:$true] %s187
          %193 = dma.hbm_to_vmem [thread:$0]  %s186, 2048, %s188, %s177, 128, 128, 8
        $region24: #{tpu_custom_call.1} parent=15 // pred_fallthru
          _
        // Predicated region
        $region25: #{tpu_custom_call.1} parent=15 // pred_check
          %p194 = pneg %p88
        $region26: #{tpu_custom_call.1} parent=15 // pred_check_branch
          %196 = sbr.rel (%p194) target = $region28
        $region27: #{tpu_custom_call.1} parent=15 // pred_region
          %p197 = scmp.lt.s32.totalorder %s16, 2
          %s198 = scalar_select %p197, %s16, 2
          %s199 = scalar_lea.vmem %s2, %s198
        $region28: #{tpu_custom_call.1} parent=15 // pred_fallthru
          _
        // Predicated region
        $region29: #{tpu_custom_call.1} parent=15 // pred_check
          %p200 = pneg %p114
        $region30: #{tpu_custom_call.1} parent=15 // pred_check_branch
          %202 = sbr.rel (%p200) target = $region32
        $region31: #{tpu_custom_call.1} parent=15 // pred_region
          %p203 = scmp.lt.s32.totalorder %s16, 2
          %s204 = scalar_select %p203, %s16, 2
          %s205 = smul.addr %s204, 2
          %s206 = smul.addr %s205, 8
          %s207 = scalar_lea.vmem %s3, %s206
        $region32: #{tpu_custom_call.1} parent=15 // pred_fallthru
          _
      $region16: #{tpu_custom_call.1} parent=5 // pred_fallthru
        _
      %p208 = scmp.le.s32.totalorder 1, %s16
      %p209 = scmp.lt.s32.totalorder %s16, 4
      %p210 = pnand %p208, %p209
      %p211 = pneg %p210
      // Predicated region
      $region33: #{tpu_custom_call.1} parent=5 // pred_check
        _
      $region34: #{tpu_custom_call.1} parent=5 // pred_check_branch
        %213 = sbr.rel (%p210) target = $region36
      $region35: #{tpu_custom_call.1} parent=5 // pred_region
        %s214 = ssub.s32 %s16, 1
        %s215 = sand.u32 %s55, 1
        %s216 = scalar_lea.sflag [#allocation3], %s215
        %s217 = sand.u32 %s55, 1
        %s218 = smul.addr %s217, 128
        %s219 = scalar_lea.vmem [#allocation2], %s218
        // Predicated region
        $region37: #{tpu_custom_call.1} parent=35 // pred_check
          %p220 = pneg %p68
        $region38: #{tpu_custom_call.1} parent=35 // pred_check_branch
          %222 = sbr.rel (%p220) target = $region40
        $region39: #{tpu_custom_call.1} parent=35 // pred_region
          %223 = dma.done %s216, 2048
        $region40: #{tpu_custom_call.1} parent=35 // pred_fallthru
          _
        %p224 = scmp.lt.s32.totalorder %s21, 2
        %s225 = scalar_select %p224, %s21, 2
        %s226 = smul.addr %s225, 2
        %s227 = smul.addr %s226, 8
        %s228 = scalar_lea.vmem %s0, %s227
        %p229 = pneg %p42
        %p230 = pneg %p39
        %s231 = sand.u32 %s55, 1
        %s232 = scalar_lea.sflag [#allocation3], %s231
        %s233 = sand.u32 %s55, 1
        %s234 = smul.addr %s233, 128
        %s235 = scalar_lea.vmem [#allocation2], %s234
        %p236 = pneg %p68
        %p237 = pneg %p65
        %p238 = scmp.lt.s32.totalorder %s21, 2
        %s239 = scalar_select %p238, %s21, 2
        %s240 = scalar_lea.vmem %s2, %s239
        %p241 = pneg %p94
        %p242 = pneg %p91
        %p243 = scmp.lt.s32.totalorder %s21, 2
        %s244 = scalar_select %p243, %s21, 2
        %s245 = smul.addr %s244, 2
        %s246 = smul.addr %s245, 8
        %s247 = scalar_lea.vmem %s3, %s246
        %p248 = pneg %p120
        %p249 = pneg %p117
        %p250 = pneg %p146
        %p251 = pneg %p143
        %s252 = sand.u32 %s133, 1
        %s253 = scalar_lea.sflag [#allocation4], %s252
        %s254 = sand.u32 %s133, 1
        %s255 = smul.addr %s254, 16
        %s256 = scalar_lea.vmem [#allocation5], %s255
        %p257 = scmp.lt.s32.totalorder %s21, 2
        %s258 = scalar_select %p257, %s21, 2
        %s259 = smul.addr %s258, 2
        %s260 = smul.addr %s259, 8
        %s261 = scalar_lea.vmem %s0, %s260
        %p262 = scmp.lt.s32.totalorder %s21, 2
        %s263 = scalar_select %p262, %s21, 2
        %s264 = scalar_lea.vmem %s2, %s263
        %p265 = scmp.lt.s32.totalorder %s21, 2
        %s266 = scalar_select %p265, %s21, 2
        %s267 = smul.addr %s266, 2
        %s268 = smul.addr %s267, 8
        %s269 = scalar_lea.vmem %s3, %s268
        %v270 = vld [vmem:[%s261] sm:$0xff]
        %v271 = vld [vmem:[%s261 + $0x8] sm:$0xff]
        %v272 = vld [vmem:[%s219] sm:$0xff]
        %v273 = vld [vmem:[%s219 + $0x8] sm:$0xff]
        %v274 = vld [vmem:[%s219 + $0x10] sm:$0xff]
        %v275 = vld [vmem:[%s219 + $0x18] sm:$0xff]
        %v276 = vld [vmem:[%s219 + $0x20] sm:$0xff]
        %v277 = vld [vmem:[%s219 + $0x28] sm:$0xff]
        %v278 = vld [vmem:[%s219 + $0x30] sm:$0xff]
        %v279 = vld [vmem:[%s219 + $0x38] sm:$0xff]
        %v280 = vld [vmem:[%s219 + $0x40] sm:$0xff]
        %v281 = vld [vmem:[%s219 + $0x48] sm:$0xff]
        %v282 = vld [vmem:[%s219 + $0x50] sm:$0xff]
        %v283 = vld [vmem:[%s219 + $0x58] sm:$0xff]
        %v284 = vld [vmem:[%s219 + $0x60] sm:$0xff]
        %v285 = vld [vmem:[%s219 + $0x68] sm:$0xff]
        %v286 = vld [vmem:[%s219 + $0x70] sm:$0xff]
        %v287 = vld [vmem:[%s219 + $0x78] sm:$0xff]
        %v288 = vld [vmem:[%s264] sm:$0x1]
        %v290 = vlaneseq
        %v291 = vshrl.u32 %v290, 7
        %v292 = vsub.s32 0, %v291
        %v293 = vrot.slane %v288, %v292
        %295 = vmatprep.subr.mxu0 0.0
        %296 = vmatpush1.msra.mxu0 %v272
        %297 = vmatprep.subr.mxu0 0.0
        %298 = vmatpush1.msra.mxu0 %v273
        %299 = vmatprep.subr.mxu0 0.0
        %300 = vmatpush1.msra.mxu0 %v274
        %301 = vmatprep.subr.mxu0 0.0
        %302 = vmatpush1.msra.mxu0 %v275
        %303 = vmatprep.subr.mxu0 0.0
        %304 = vmatpush1.msra.mxu0 %v276
        %305 = vmatprep.subr.mxu0 0.0
        %306 = vmatpush1.msra.mxu0 %v277
        %307 = vmatprep.subr.mxu0 0.0
        %308 = vmatpush1.msra.mxu0 %v278
        %309 = vmatprep.subr.mxu0 0.0
        %310 = vmatpush1.msra.mxu0 %v279
        %311 = vmatprep.subr.mxu0 0.0
        %312 = vmatpush1.msra.mxu0 %v280
        %313 = vmatprep.subr.mxu0 0.0
        %314 = vmatpush1.msra.mxu0 %v281
        %315 = vmatprep.subr.mxu0 0.0
        %316 = vmatpush1.msra.mxu0 %v282
        %317 = vmatprep.subr.mxu0 0.0
        %318 = vmatpush1.msra.mxu0 %v283
        %319 = vmatprep.subr.mxu0 0.0
        %320 = vmatpush1.msra.mxu0 %v284
        %321 = vmatprep.subr.mxu0 0.0
        %322 = vmatpush1.msra.mxu0 %v285
        %323 = vmatprep.subr.mxu0 0.0
        %324 = vmatpush1.msra.mxu0 %v286
        %325 = vmatprep.subr.mxu0 0.0
        %326 = vmatpush1.msra.mxu0 %v287
        %327 = vmatprep.subr.mxu0 0.0
        %328 = vmatpush1.msra.mxu0 0.0
        %329 = vmatprep.subr.mxu0 0.0
        %330 = vmatpush1.msra.mxu0 0.0
        %331 = vmatprep.subr.mxu0 0.0
        %332 = vmatpush1.msra.mxu0 0.0
        %333 = vmatprep.subr.mxu0 0.0
        %334 = vmatpush1.msra.mxu0 0.0
        %335 = vmatprep.subr.mxu0 0.0
        %336 = vmatpush1.msra.mxu0 0.0
        %337 = vmatprep.subr.mxu0 0.0
        %338 = vmatpush1.msra.mxu0 0.0
        %339 = vmatprep.subr.mxu0 0.0
        %340 = vmatpush1.msra.mxu0 0.0
        %341 = vmatprep.subr.mxu0 0.0
        %342 = vmatpush1.msra.mxu0 0.0
        %343 = vmatprep.subr.mxu0 0.0
        %344 = vmatpush1.msra.mxu0 0.0
        %345 = vmatprep.subr.mxu0 0.0
        %346 = vmatpush1.msra.mxu0 0.0
        %347 = vmatprep.subr.mxu0 0.0
        %348 = vmatpush1.msra.mxu0 0.0
        %349 = vmatprep.subr.mxu0 0.0
        %350 = vmatpush1.msra.mxu0 0.0
        %351 = vmatprep.subr.mxu0 0.0
        %352 = vmatpush1.msra.mxu0 0.0
        %353 = vmatprep.subr.mxu0 0.0
        %354 = vmatpush1.msra.mxu0 0.0
        %355 = vmatprep.subr.mxu0 0.0
        %356 = vmatpush1.msra.mxu0 0.0
        %357 = vmatprep.subr.mxu0 0.0
        %358 = vmatpush1.msra.mxu0 0.0
        %359 = vmatprep.mubr.f32.mxu0 0.0
        %360 = vmatmul.mubr.f32.gmra.mrb[0].mxu0 %v270
        %v361 = vpop.f32.mrb[0].mxu0
        %v362 = vadd.f32 %v293, %v361
        %v363 = vpop.f32.mrb[0].mxu0
        %364 = vmatprep.mubr.f32.mxu0 0.0
        %365 = vmatmul.mubr.f32.gmra.mrb[0].mxu0 %v271
        %v366 = vpop.f32.mrb[0].mxu0
        %v367 = vadd.f32 %v293, %v366
        %v368 = vpop.f32.mrb[0].mxu0
        %369 = vdwg.mxu0
        %v370 = vld [vmem:[%s269] sm:$0xff]
        %v371 = vld [vmem:[%s269 + $0x8] sm:$0xff]
        %373 = vset.pattern.permute.xlu0 0
        %374 = vperm.xlu0 %373, %v370
        %v375 = vpop.permute.xlu0 %374
        %378 = vset.pattern.permute.xlu0 0
        %379 = vperm.xlu0 %378, %v371
        %v380 = vpop.permute.xlu0 %379
        %v382 = vmul.f32 %v362, %v375
        %v383 = vmul.f32 %v367, %v380
        %384 = vst [vmem:[%s256] sm:$0xff] %v382
        %385 = vst [vmem:[%s256 + $0x8] sm:$0xff] %v383
        %s386 = sand.u32 %s133, 1
        %s387 = scalar_lea.sflag [#allocation4], %s386
        %s388 = sand.u32 %s133, 1
        %s389 = smul.addr %s388, 16
        %s390 = scalar_lea.vmem [#allocation5], %s389
        // Predicated region
        $region41: #{tpu_custom_call.1} parent=35 // pred_check
          %p391 = pneg %p143
        $region42: #{tpu_custom_call.1} parent=35 // pred_check_branch
          %393 = sbr.rel (%p391) target = $region44
        $region43: #{tpu_custom_call.1} parent=35 // pred_region
          %s395 = ssub.s32 256, 256
          %396 = vsyncadd %s387, %s395
          %s397 = smul.addr %s21, 2
          %s398 = smul.addr %s397, 128
          %s399 = scalar_lea.hbm %s4, %s398
          %s400 = sshll.u32 %s390, 4
          %s401 = int_to_ptr.vmem [resolvable:$true] %s400
          %406 = dma.vmem_to_hbm [thread:$0]  %s401, 256, %s399, %s387, 128, 128, 8
        $region44: #{tpu_custom_call.1} parent=35 // pred_fallthru
          _
      $region36: #{tpu_custom_call.1} parent=5 // pred_fallthru
        _
      %p407 = scmp.le.s32.totalorder 2, %s16
      // Predicated region
      $region45: #{tpu_custom_call.1} parent=5 // pred_check
        %p408 = pneg %p407
      $region46: #{tpu_custom_call.1} parent=5 // pred_check_branch
        %410 = sbr.rel (%p408) target = $region48
      $region47: #{tpu_custom_call.1} parent=5 // pred_region
        %s411 = ssub.s32 %s16, 2
        // Predicated region
        $region49: #{tpu_custom_call.1} parent=47 // pred_check
          %p412 = pneg %p149
        $region50: #{tpu_custom_call.1} parent=47 // pred_check_branch
          %414 = sbr.rel (%p412) target = $region52
        $region51: #{tpu_custom_call.1} parent=47 // pred_region
          %s415 = sand.u32 %s134, 1
          %s416 = scalar_lea.sflag [#allocation4], %s415
          %s417 = sand.u32 %s134, 1
          %s418 = smul.addr %s417, 16
          %s419 = scalar_lea.vmem [#allocation5], %s418
          %420 = dma.done %s416, 256
        $region52: #{tpu_custom_call.1} parent=47 // pred_fallthru
          _
      $region48: #{tpu_custom_call.1} parent=5 // pred_fallthru
        _
    $region6: #{tpu_custom_call.1} parent=1 // loop_footer
      %s20 = sadd.s32 1, %s16
    $region7: #{tpu_custom_call.1} parent=1 // loop_footer_branch
      %15 = sbr.rel target = $region3
    $region8: #{tpu_custom_call.1} parent=1 // loop_exit
      _
    %421 = vsyncpa [#allocation3], 1
    %s422 = scalar_lea.sflag [#allocation3], 1
    %423 = vsyncpa %s422, 1
    %424 = vsyncpa [#allocation4], 1
    %s425 = scalar_lea.sflag [#allocation4], 1
    %426 = vsyncpa %s425, 1

</llo_original>
